<compile_context>
chip_gen: v6e
topology: v6e:2x2x1
jax: 0.10.0
libtpu: 0.0.40
codegen_flags: <defaults>
</compile_context>

<pallas_src>
import jax
import jax.numpy as jnp
from jax.experimental import pallas as pl
from jax.experimental.pallas import tpu as pltpu


def _identity_kernel(x_hbm_ref, o_hbm_ref):
    # The output HBM buffer is aliased to the input HBM buffer
    # (input_output_aliases={0: 0} in the pallas_call below), so the result is
    # already in place.  Intentionally no loads, stores, or DMAs: a true
    # zero-byte identity.
    del x_hbm_ref, o_hbm_ref


def variable_size_inspector(x):
    """Identity forward pass (VariableSizeInspector.forward): returns x unchanged."""
    # Degenerate cases where launching a kernel is pointless.
    if x.size == 0 or x.ndim == 0:
        return x

    return pl.pallas_call(
        _identity_kernel,
        out_shape=jax.ShapeDtypeStruct(x.shape, x.dtype),
        # Leave both operands in HBM; no auto-DMA, no block tiling constraints.
        in_specs=[pl.BlockSpec(memory_space=pl.ANY)],
        out_specs=pl.BlockSpec(memory_space=pl.ANY),
        # Output buffer is the input buffer -> zero bytes moved by the kernel.
        input_output_aliases={0: 0},
        compiler_params=pltpu.CompilerParams(
            # Keep the (otherwise empty-looking) call from being reordered/elided.
            has_side_effects=True,
        ),
        # Advertise to XLA's scheduler that this is free.
        cost_estimate=pl.CostEstimate(flops=0, transcendentals=0, bytes_accessed=0),
    )(x)


if __name__ == "__main__":
    key = jax.random.PRNGKey(0)

    # Small NCHW-style input consistent with a typical module input:
    # batch=2, channels=4, spatial=16x16.
    x = jax.random.normal(key, (2, 4, 16, 16), dtype=jnp.float32)
    y = variable_size_inspector(x)
    jax.block_until_ready(y)
    assert y.shape == x.shape and y.dtype == x.dtype
    assert jnp.array_equal(y, x)

    # "Variable size" check: ragged shape AND a sub-32-bit dtype — handled
    # natively with no packing, padding, or slicing passes.
    x2 = jax.random.normal(jax.random.PRNGKey(1), (3, 5, 7), dtype=jnp.bfloat16)
    y2 = variable_size_inspector(x2)
    jax.block_until_ready(y2)
    assert y2.shape == x2.shape and y2.dtype == x2.dtype
    assert jnp.array_equal(y2, x2)

    print("KERNEL_OK")
</pallas_src>

<mosaic_0001>
module attributes {stable_mosaic.version = 11 : i64} {
  func.func @_identity_kernel(%arg0: memref<2x4x16x16xf32, #tpu.memory_space<any>>, %arg1: memref<2x4x16x16xf32, #tpu.memory_space<any>>) attributes {dimension_semantics = [], scalar_prefetch = 0 : i64, scratch_operands = 0 : i64, tpu.core_type = #tpu.core_type<tc>} {
    return
  }
}

</mosaic_0001>

<llo_original>
// kernel: tpu_custom_call.1
$region0: #{tpu_custom_call.1}
  #allocation0 [shape = 'u32[]', space=smem, size = 0x4, offset = 0x4, fixed_abs, tag = 'smem constant byte address 0x4 - core index']
  #allocation1 [shape = 'u32[144,128]{1,0:T(1,128)}', space=vmem, size = 0x12000, scoped, tag = 'internal scratch']
  %s0 = inlined_call_operand.hbm [shape: f32[2,4,16,16], index: 0, kind: input, shape index: {}, may-alias: {0,1}]
  %s1 = inlined_call_operand.hbm [shape: f32[2,4,16,16], index: 1, kind: output, shape index: {}, may-alias: {0,1}]
  %s2 = sld [smem:[#allocation0]]
  $region2: #{tpu_custom_call.1} parent=0
    _
  %s4 = ssub.s32 1, %s2
  %s5 = scalar_select 0, %s4, %s2

</llo_original>
